<compile_context>
chip_gen: v7x
topology: tpu7x:2x2x1
jax: 0.10.0
libtpu: 0.0.40
codegen_flags: <defaults>
</compile_context>

<pallas_src>
import functools

import numpy as np
import jax
import jax.numpy as jnp
from jax.experimental import pallas as pl
from jax.experimental.pallas import tpu as pltpu

KH, KW = 5, 5              # kernel_size
M = 2                      # out channels per group (514 / 257)
CIN = 257                  # conv1 in_channels (groups=257 -> depthwise, multiplier 2)
PAD_W = (KW - 1) * 1 + 1   # CausalConv2d._pad   = 5 (left-only pad on W, crop last col)
PAD_H = KH // 2            # CausalConv2d._pad_h = 2 (symmetric pad on conv "H" axis = B)
NTAP = KH * KW             # 25


def _freq_rows_kernel(win_ref, par_ref, means_ref, stds_ref, *, var_row0):
    """Fused causal depthwise 5x5 conv for means/log_var rows + exp(0.5*log_var).

    win_ref:   (R, W+PAD_W, T)  gathered, already-padded input windows.
               means stream uses window rows [0, KH), log_var stream uses
               rows [var_row0, var_row0 + KH)   (var_row0 == 1 when deduped).
    par_ref:   (2, NTAP+1, T)   per-row conv taps (25) + bias (last row), per stream.
    means_ref / stds_ref: (W, T)  W on sublanes, gathered rows on lanes.
    """
    w_out, t = means_ref.shape

    def conv(row0, s):
        par = par_ref[s]                                            # (NTAP+1, T)
        # accumulator initialised from the bias (stride-0 sublane broadcast)
        acc = jnp.broadcast_to(par[NTAP:NTAP + 1, :], (w_out, t))
        for kh in range(KH):                                        # static 5x5 unroll
            row = win_ref[row0 + kh]                                # (W+PAD_W, T)
            for kw in range(KW):
                r = kh * KW + kw
                acc = acc + par[r:r + 1, :] * row[kw:kw + w_out, :]
        return acc

    means_ref[...] = conv(0, 0)
    # exp rides the EUP slot; fused here -> no second kernel / HBM round trip.
    stds_ref[...] = jnp.exp(0.5 * conv(var_row0, 1))


def _pick_lane_tile(n_pad, bytes_per_lane, budget_bytes=28 << 20):
    """Largest lane tile (multiple of 128) whose double-buffered working set
    fits the VMEM budget, preferring >=2 grid steps so both v7x TCs get work."""
    fits = [t for t in (512, 384, 256, 128)
            if n_pad % t == 0 and 2 * bytes_per_lane * t <= budget_bytes]
    if not fits:
        return 128
    multi = [t for t in fits if n_pad // t >= 2]
    return multi[0] if multi else fits[-1]


def network_freq_forward(x, cur_gt, w_torch, b_torch):
    """NetworkFreq.forward.  x: (B, C, H, W) NCHW with H*C == 257; cur_gt unused."""
    del cur_gt  # unused by the PyTorch forward as well
    B, C, H, W = x.shape
    assert H * C == CIN, "conv1 has in_channels=257 => H*C must equal 257"

    # torch: self.conv1(x.transpose(1, 2).reshape(H * C, B, -1))  (unbatched conv)
    y = jnp.transpose(x, (0, 2, 1, 3)).reshape(H * C, B, W)
    ypad = jnp.pad(y, ((0, 0), (PAD_H, PAD_H), (PAD_W, 0)))        # (257, B+4, W+PAD_W)
    WP = W + PAD_W

    # --- static (trace-time) index math: which conv rows the forward consumes.
    # conv_out (514, B, W) -> reshape (B, H, 2C, W) -> transpose(1,2); only
    # channel c2 in {0 (means), 1 (log_var)} survives => 2*B*H rows of 514*B.
    N = B * H
    bp = np.repeat(np.arange(B, dtype=np.int32), H)
    hh = np.tile(np.arange(H, dtype=np.int32), B)
    o_idx = np.zeros((2, N), np.int32)    # conv output channel
    b2_idx = np.zeros((2, N), np.int32)   # conv spatial row (padded-B axis start)
    for c2 in range(2):
        comb = bp * (2 * H * C) + hh * (2 * C) + c2
        o_idx[c2] = comb // B
        b2_idx[c2] = comb % B
    g_idx = o_idx // M                    # depthwise group == conv input channel

    # Dedup the two streams' windows: they almost always share the same input
    # channel and are offset by one conv row, so one (KH+1)-row window covers both.
    dedup = bool(np.all(g_idx[1] == g_idx[0]) and np.all(b2_idx[1] == b2_idx[0] + 1))
    if dedup:
        R, var_row0 = KH + 1, 1
        rows = b2_idx[0][:, None] + np.arange(R)[None, :]           # (N, R) static
        win = ypad[g_idx[0][:, None], rows, :]                       # (N, R, WP)
    else:
        R, var_row0 = 2 * KH, KH
        win = jnp.concatenate(
            [ypad[g_idx[c][:, None], b2_idx[c][:, None] + np.arange(KH)[None, :], :]
             for c in range(2)], axis=1)                             # (N, 2*KH, WP)

    # Per-row taps (25) + bias packed into one small table per stream.
    w_flat = w_torch.reshape(M * CIN, NTAP)                          # (514, 25)
    par = jnp.stack(
        [jnp.concatenate([w_flat[o_idx[c]], b_torch[o_idx[c]][:, None]], axis=1)
         for c in range(2)], axis=0)                                 # (2, N, 26)

    # Lane-dense layout: gathered rows (padded to a multiple of 128) on lanes.
    # TODO(synk): for very large B*H move the row gather in-kernel via
    # PrefetchScalarGridSpec + manual DMA instead of materializing gathered HBM
    # windows; for an H==1 production layout with W >= 128 a W-on-lanes variant
    # of this kernel would use lanes even better.
    n_pad = ((N + 127) // 128) * 128
    win = jnp.pad(jnp.transpose(win, (1, 2, 0)), ((0, 0), (0, 0), (0, n_pad - N)))
    par = jnp.pad(jnp.transpose(par, (0, 2, 1)), ((0, 0), (0, 0), (0, n_pad - N)))

    bytes_per_lane = 4 * (R * WP + 2 * (NTAP + 1) + 2 * W)
    lane_tile = _pick_lane_tile(n_pad, bytes_per_lane)
    grid = (n_pad // lane_tile,)

    kernel = functools.partial(_freq_rows_kernel, var_row0=var_row0)
    means_t, stds_t = pl.pallas_call(
        kernel,
        out_shape=(jax.ShapeDtypeStruct((W, n_pad), jnp.float32),
                   jax.ShapeDtypeStruct((W, n_pad), jnp.float32)),
        grid=grid,
        in_specs=[pl.BlockSpec((R, WP, lane_tile), lambda i: (0, 0, i)),
                  pl.BlockSpec((2, NTAP + 1, lane_tile), lambda i: (0, 0, i))],
        out_specs=(pl.BlockSpec((W, lane_tile), lambda i: (0, i)),
                   pl.BlockSpec((W, lane_tile), lambda i: (0, i))),
        compiler_params=pltpu.CompilerParams(
            dimension_semantics=("parallel",),          # megacore-shardable (v7x)
            vmem_limit_bytes=48 * 1024 * 1024),
        cost_estimate=pl.CostEstimate(
            flops=2 * 2 * NTAP * W * n_pad,
            transcendentals=W * n_pad,
            bytes_accessed=bytes_per_lane * n_pad),
    )(win, par)

    # Un-transpose; zero-padded tail lanes (exp(0)=1 in stds) are sliced off.
    means = jnp.transpose(means_t[:, :N], (1, 0)).reshape(B, H, W)
    stds = jnp.transpose(stds_t[:, :N], (1, 0)).reshape(B, H, W)
    return means, stds


def _ref_forward(x, w_torch, b_torch):
    """Pure-JAX reference (lax grouped conv) mirroring the PyTorch code exactly."""
    B, C, H, W = x.shape
    y = jnp.transpose(x, (0, 2, 1, 3)).reshape(H * C, B, W)
    ypad = jnp.pad(y, ((0, 0), (PAD_H, PAD_H), (PAD_W, 0)))[None]
    out = jax.lax.conv_general_dilated(
        ypad, w_torch, window_strides=(1, 1), padding="VALID",
        dimension_numbers=("NCHW", "OIHW", "NCHW"),
        feature_group_count=H * C)
    out = out[0] + b_torch[:, None, None]
    out = out[:, :, :-1]                                            # causal crop
    xr = jnp.transpose(out.reshape(B, H, C * 2, W), (0, 2, 1, 3))
    return xr[:, 0], jnp.exp(0.5 * xr[:, 1])


if __name__ == "__main__":
    # Small shapes consistent with the module: conv1 forces H*C == 257.
    B, C, H, W = 2, 257, 1, 8
    key = jax.random.PRNGKey(0)
    kx, kg, kw_key, kb = jax.random.split(key, 4)
    x = jax.random.normal(kx, (B, C, H, W), jnp.float32)
    cur_gt = jax.random.normal(kg, (B, C, H, W), jnp.float32)  # unused by forward

    # Deterministic parameter init (same shapes as nn.Conv2d(257, 514, (5,5), groups=257)).
    fan_in = 1 * KH * KW
    bound = 1.0 / np.sqrt(fan_in)
    w_torch = jax.random.uniform(kw_key, (M * CIN, 1, KH, KW), jnp.float32, -bound, bound)
    b_torch = jax.random.uniform(kb, (M * CIN,), jnp.float32, -bound, bound)

    means, stds = jax.jit(network_freq_forward)(x, cur_gt, w_torch, b_torch)
    jax.block_until_ready((means, stds))

    assert means.shape == (B, H, W) and stds.shape == (B, H, W)
    ref_means, ref_stds = _ref_forward(x, w_torch, b_torch)
    np.testing.assert_allclose(np.asarray(means), np.asarray(ref_means), rtol=1e-5, atol=1e-5)
    np.testing.assert_allclose(np.asarray(stds), np.asarray(ref_stds), rtol=1e-5, atol=1e-5)
    print("KERNEL_OK")
</pallas_src>

<mosaic_0001>
module attributes {stable_mosaic.version = 11 : i64} {
  func.func @_freq_rows_kernel(%arg0: i32, %arg1: memref<6x13x128xf32, #tpu.memory_space<vmem>>, %arg2: memref<2x26x128xf32, #tpu.memory_space<vmem>>, %arg3: memref<8x128xf32, #tpu.memory_space<vmem>>, %arg4: memref<8x128xf32, #tpu.memory_space<vmem>>) attributes {dimension_semantics = [#tpu.dimension_semantics<parallel>], iteration_bounds = array<i64: 1>, scalar_prefetch = 0 : i64, scratch_operands = 0 : i64, tpu.core_type = #tpu.core_type<tc>, window_params = [{transform_indices = @transform_0, window_bounds = array<i64: 6, 13, 128>}, {transform_indices = @transform_1, window_bounds = array<i64: 2, 26, 128>}, {transform_indices = @transform_2, window_bounds = array<i64: 8, 128>}, {transform_indices = @transform_3, window_bounds = array<i64: 8, 128>}]} {
    %c0 = arith.constant 0 : index
    %c0_0 = arith.constant 0 : index
    %c0_1 = arith.constant 0 : index
    %0 = vector.load %arg2[%c0, %c0_0, %c0_1] : memref<2x26x128xf32, #tpu.memory_space<vmem>>, vector<1x26x128xf32>
    %1 = vector.shape_cast %0 : vector<1x26x128xf32> to vector<26x128xf32>
    %2 = vector.extract_strided_slice %1 {offsets = [25, 0], sizes = [1, 128], strides = [1, 1]} : vector<26x128xf32> to vector<1x128xf32>
    %3 = vector.shape_cast %2 : vector<1x128xf32> to vector<1x128xf32>
    %4 = vector.broadcast %3 : vector<1x128xf32> to vector<8x128xf32>
    %c0_2 = arith.constant 0 : index
    %c0_3 = arith.constant 0 : index
    %c0_4 = arith.constant 0 : index
    %5 = vector.load %arg1[%c0_2, %c0_3, %c0_4] : memref<6x13x128xf32, #tpu.memory_space<vmem>>, vector<1x13x128xf32>
    %6 = vector.shape_cast %5 : vector<1x13x128xf32> to vector<13x128xf32>
    %7 = vector.extract_strided_slice %1 {offsets = [0, 0], sizes = [1, 128], strides = [1, 1]} : vector<26x128xf32> to vector<1x128xf32>
    %8 = vector.extract_strided_slice %6 {offsets = [0, 0], sizes = [8, 128], strides = [1, 1]} : vector<13x128xf32> to vector<8x128xf32>
    %9 = vector.broadcast %7 : vector<1x128xf32> to vector<8x128xf32>
    %10 = arith.mulf %9, %8 : vector<8x128xf32>
    %11 = arith.addf %4, %10 : vector<8x128xf32>
    %12 = vector.extract_strided_slice %1 {offsets = [1, 0], sizes = [1, 128], strides = [1, 1]} : vector<26x128xf32> to vector<1x128xf32>
    %13 = vector.extract_strided_slice %6 {offsets = [1, 0], sizes = [8, 128], strides = [1, 1]} : vector<13x128xf32> to vector<8x128xf32>
    %14 = vector.broadcast %12 : vector<1x128xf32> to vector<8x128xf32>
    %15 = arith.mulf %14, %13 : vector<8x128xf32>
    %16 = arith.addf %11, %15 : vector<8x128xf32>
    %17 = vector.extract_strided_slice %1 {offsets = [2, 0], sizes = [1, 128], strides = [1, 1]} : vector<26x128xf32> to vector<1x128xf32>
    %18 = vector.extract_strided_slice %6 {offsets = [2, 0], sizes = [8, 128], strides = [1, 1]} : vector<13x128xf32> to vector<8x128xf32>
    %19 = vector.broadcast %17 : vector<1x128xf32> to vector<8x128xf32>
    %20 = arith.mulf %19, %18 : vector<8x128xf32>
    %21 = arith.addf %16, %20 : vector<8x128xf32>
    %22 = vector.extract_strided_slice %1 {offsets = [3, 0], sizes = [1, 128], strides = [1, 1]} : vector<26x128xf32> to vector<1x128xf32>
    %23 = vector.extract_strided_slice %6 {offsets = [3, 0], sizes = [8, 128], strides = [1, 1]} : vector<13x128xf32> to vector<8x128xf32>
    %24 = vector.broadcast %22 : vector<1x128xf32> to vector<8x128xf32>
    %25 = arith.mulf %24, %23 : vector<8x128xf32>
    %26 = arith.addf %21, %25 : vector<8x128xf32>
    %27 = vector.extract_strided_slice %1 {offsets = [4, 0], sizes = [1, 128], strides = [1, 1]} : vector<26x128xf32> to vector<1x128xf32>
    %28 = vector.extract_strided_slice %6 {offsets = [4, 0], sizes = [8, 128], strides = [1, 1]} : vector<13x128xf32> to vector<8x128xf32>
    %29 = vector.broadcast %27 : vector<1x128xf32> to vector<8x128xf32>
    %30 = arith.mulf %29, %28 : vector<8x128xf32>
    %31 = arith.addf %26, %30 : vector<8x128xf32>
    %c1 = arith.constant 1 : index
    %c0_5 = arith.constant 0 : index
    %c0_6 = arith.constant 0 : index
    %32 = vector.load %arg1[%c1, %c0_5, %c0_6] : memref<6x13x128xf32, #tpu.memory_space<vmem>>, vector<1x13x128xf32>
    %33 = vector.shape_cast %32 : vector<1x13x128xf32> to vector<13x128xf32>
    %34 = vector.extract_strided_slice %1 {offsets = [5, 0], sizes = [1, 128], strides = [1, 1]} : vector<26x128xf32> to vector<1x128xf32>
    %35 = vector.extract_strided_slice %33 {offsets = [0, 0], sizes = [8, 128], strides = [1, 1]} : vector<13x128xf32> to vector<8x128xf32>
    %36 = vector.broadcast %34 : vector<1x128xf32> to vector<8x128xf32>
    %37 = arith.mulf %36, %35 : vector<8x128xf32>
    %38 = arith.addf %31, %37 : vector<8x128xf32>
    %39 = vector.extract_strided_slice %1 {offsets = [6, 0], sizes = [1, 128], strides = [1, 1]} : vector<26x128xf32> to vector<1x128xf32>
    %40 = vector.extract_strided_slice %33 {offsets = [1, 0], sizes = [8, 128], strides = [1, 1]} : vector<13x128xf32> to vector<8x128xf32>
    %41 = vector.broadcast %39 : vector<1x128xf32> to vector<8x128xf32>
    %42 = arith.mulf %41, %40 : vector<8x128xf32>
    %43 = arith.addf %38, %42 : vector<8x128xf32>
    %44 = vector.extract_strided_slice %1 {offsets = [7, 0], sizes = [1, 128], strides = [1, 1]} : vector<26x128xf32> to vector<1x128xf32>
    %45 = vector.extract_strided_slice %33 {offsets = [2, 0], sizes = [8, 128], strides = [1, 1]} : vector<13x128xf32> to vector<8x128xf32>
    %46 = vector.broadcast %44 : vector<1x128xf32> to vector<8x128xf32>
    %47 = arith.mulf %46, %45 : vector<8x128xf32>
    %48 = arith.addf %43, %47 : vector<8x128xf32>
    %49 = vector.extract_strided_slice %1 {offsets = [8, 0], sizes = [1, 128], strides = [1, 1]} : vector<26x128xf32> to vector<1x128xf32>
    %50 = vector.extract_strided_slice %33 {offsets = [3, 0], sizes = [8, 128], strides = [1, 1]} : vector<13x128xf32> to vector<8x128xf32>
    %51 = vector.broadcast %49 : vector<1x128xf32> to vector<8x128xf32>
    %52 = arith.mulf %51, %50 : vector<8x128xf32>
    %53 = arith.addf %48, %52 : vector<8x128xf32>
    %54 = vector.extract_strided_slice %1 {offsets = [9, 0], sizes = [1, 128], strides = [1, 1]} : vector<26x128xf32> to vector<1x128xf32>
    %55 = vector.extract_strided_slice %33 {offsets = [4, 0], sizes = [8, 128], strides = [1, 1]} : vector<13x128xf32> to vector<8x128xf32>
    %56 = vector.broadcast %54 : vector<1x128xf32> to vector<8x128xf32>
    %57 = arith.mulf %56, %55 : vector<8x128xf32>
    %58 = arith.addf %53, %57 : vector<8x128xf32>
    %c2 = arith.constant 2 : index
    %c0_7 = arith.constant 0 : index
    %c0_8 = arith.constant 0 : index
    %59 = vector.load %arg1[%c2, %c0_7, %c0_8] : memref<6x13x128xf32, #tpu.memory_space<vmem>>, vector<1x13x128xf32>
    %60 = vector.shape_cast %59 : vector<1x13x128xf32> to vector<13x128xf32>
    %61 = vector.extract_strided_slice %1 {offsets = [10, 0], sizes = [1, 128], strides = [1, 1]} : vector<26x128xf32> to vector<1x128xf32>
    %62 = vector.extract_strided_slice %60 {offsets = [0, 0], sizes = [8, 128], strides = [1, 1]} : vector<13x128xf32> to vector<8x128xf32>
    %63 = vector.broadcast %61 : vector<1x128xf32> to vector<8x128xf32>
    %64 = arith.mulf %63, %62 : vector<8x128xf32>
    %65 = arith.addf %58, %64 : vector<8x128xf32>
    %66 = vector.extract_strided_slice %1 {offsets = [11, 0], sizes = [1, 128], strides = [1, 1]} : vector<26x128xf32> to vector<1x128xf32>
    %67 = vector.extract_strided_slice %60 {offsets = [1, 0], sizes = [8, 128], strides = [1, 1]} : vector<13x128xf32> to vector<8x128xf32>
    %68 = vector.broadcast %66 : vector<1x128xf32> to vector<8x128xf32>
    %69 = arith.mulf %68, %67 : vector<8x128xf32>
    %70 = arith.addf %65, %69 : vector<8x128xf32>
    %71 = vector.extract_strided_slice %1 {offsets = [12, 0], sizes = [1, 128], strides = [1, 1]} : vector<26x128xf32> to vector<1x128xf32>
    %72 = vector.extract_strided_slice %60 {offsets = [2, 0], sizes = [8, 128], strides = [1, 1]} : vector<13x128xf32> to vector<8x128xf32>
    %73 = vector.broadcast %71 : vector<1x128xf32> to vector<8x128xf32>
    %74 = arith.mulf %73, %72 : vector<8x128xf32>
    %75 = arith.addf %70, %74 : vector<8x128xf32>
    %76 = vector.extract_strided_slice %1 {offsets = [13, 0], sizes = [1, 128], strides = [1, 1]} : vector<26x128xf32> to vector<1x128xf32>
    %77 = vector.extract_strided_slice %60 {offsets = [3, 0], sizes = [8, 128], strides = [1, 1]} : vector<13x128xf32> to vector<8x128xf32>
    %78 = vector.broadcast %76 : vector<1x128xf32> to vector<8x128xf32>
    %79 = arith.mulf %78, %77 : vector<8x128xf32>
    %80 = arith.addf %75, %79 : vector<8x128xf32>
    %81 = vector.extract_strided_slice %1 {offsets = [14, 0], sizes = [1, 128], strides = [1, 1]} : vector<26x128xf32> to vector<1x128xf32>
    %82 = vector.extract_strided_slice %60 {offsets = [4, 0], sizes = [8, 128], strides = [1, 1]} : vector<13x128xf32> to vector<8x128xf32>
    %83 = vector.broadcast %81 : vector<1x128xf32> to vector<8x128xf32>
    %84 = arith.mulf %83, %82 : vector<8x128xf32>
    %85 = arith.addf %80, %84 : vector<8x128xf32>
    %c3 = arith.constant 3 : index
    %c0_9 = arith.constant 0 : index
    %c0_10 = arith.constant 0 : index
    %86 = vector.load %arg1[%c3, %c0_9, %c0_10] : memref<6x13x128xf32, #tpu.memory_space<vmem>>, vector<1x13x128xf32>
    %87 = vector.shape_cast %86 : vector<1x13x128xf32> to vector<13x128xf32>
    %88 = vector.extract_strided_slice %1 {offsets = [15, 0], sizes = [1, 128], strides = [1, 1]} : vector<26x128xf32> to vector<1x128xf32>
    %89 = vector.extract_strided_slice %87 {offsets = [0, 0], sizes = [8, 128], strides = [1, 1]} : vector<13x128xf32> to vector<8x128xf32>
    %90 = vector.broadcast %88 : vector<1x128xf32> to vector<8x128xf32>
    %91 = arith.mulf %90, %89 : vector<8x128xf32>
    %92 = arith.addf %85, %91 : vector<8x128xf32>
    %93 = vector.extract_strided_slice %1 {offsets = [16, 0], sizes = [1, 128], strides = [1, 1]} : vector<26x128xf32> to vector<1x128xf32>
    %94 = vector.extract_strided_slice %87 {offsets = [1, 0], sizes = [8, 128], strides = [1, 1]} : vector<13x128xf32> to vector<8x128xf32>
    %95 = vector.broadcast %93 : vector<1x128xf32> to vector<8x128xf32>
    %96 = arith.mulf %95, %94 : vector<8x128xf32>
    %97 = arith.addf %92, %96 : vector<8x128xf32>
    %98 = vector.extract_strided_slice %1 {offsets = [17, 0], sizes = [1, 128], strides = [1, 1]} : vector<26x128xf32> to vector<1x128xf32>
    %99 = vector.extract_strided_slice %87 {offsets = [2, 0], sizes = [8, 128], strides = [1, 1]} : vector<13x128xf32> to vector<8x128xf32>
    %100 = vector.broadcast %98 : vector<1x128xf32> to vector<8x128xf32>
    %101 = arith.mulf %100, %99 : vector<8x128xf32>
    %102 = arith.addf %97, %101 : vector<8x128xf32>
    %103 = vector.extract_strided_slice %1 {offsets = [18, 0], sizes = [1, 128], strides = [1, 1]} : vector<26x128xf32> to vector<1x128xf32>
    %104 = vector.extract_strided_slice %87 {offsets = [3, 0], sizes = [8, 128], strides = [1, 1]} : vector<13x128xf32> to vector<8x128xf32>
    %105 = vector.broadcast %103 : vector<1x128xf32> to vector<8x128xf32>
    %106 = arith.mulf %105, %104 : vector<8x128xf32>
    %107 = arith.addf %102, %106 : vector<8x128xf32>
    %108 = vector.extract_strided_slice %1 {offsets = [19, 0], sizes = [1, 128], strides = [1, 1]} : vector<26x128xf32> to vector<1x128xf32>
    %109 = vector.extract_strided_slice %87 {offsets = [4, 0], sizes = [8, 128], strides = [1, 1]} : vector<13x128xf32> to vector<8x128xf32>
    %110 = vector.broadcast %108 : vector<1x128xf32> to vector<8x128xf32>
    %111 = arith.mulf %110, %109 : vector<8x128xf32>
    %112 = arith.addf %107, %111 : vector<8x128xf32>
    %c4 = arith.constant 4 : index
    %c0_11 = arith.constant 0 : index
    %c0_12 = arith.constant 0 : index
    %113 = vector.load %arg1[%c4, %c0_11, %c0_12] : memref<6x13x128xf32, #tpu.memory_space<vmem>>, vector<1x13x128xf32>
    %114 = vector.shape_cast %113 : vector<1x13x128xf32> to vector<13x128xf32>
    %115 = vector.extract_strided_slice %1 {offsets = [20, 0], sizes = [1, 128], strides = [1, 1]} : vector<26x128xf32> to vector<1x128xf32>
    %116 = vector.extract_strided_slice %114 {offsets = [0, 0], sizes = [8, 128], strides = [1, 1]} : vector<13x128xf32> to vector<8x128xf32>
    %117 = vector.broadcast %115 : vector<1x128xf32> to vector<8x128xf32>
    %118 = arith.mulf %117, %116 : vector<8x128xf32>
    %119 = arith.addf %112, %118 : vector<8x128xf32>
    %120 = vector.extract_strided_slice %1 {offsets = [21, 0], sizes = [1, 128], strides = [1, 1]} : vector<26x128xf32> to vector<1x128xf32>
    %121 = vector.extract_strided_slice %114 {offsets = [1, 0], sizes = [8, 128], strides = [1, 1]} : vector<13x128xf32> to vector<8x128xf32>
    %122 = vector.broadcast %120 : vector<1x128xf32> to vector<8x128xf32>
    %123 = arith.mulf %122, %121 : vector<8x128xf32>
    %124 = arith.addf %119, %123 : vector<8x128xf32>
    %125 = vector.extract_strided_slice %1 {offsets = [22, 0], sizes = [1, 128], strides = [1, 1]} : vector<26x128xf32> to vector<1x128xf32>
    %126 = vector.extract_strided_slice %114 {offsets = [2, 0], sizes = [8, 128], strides = [1, 1]} : vector<13x128xf32> to vector<8x128xf32>
    %127 = vector.broadcast %125 : vector<1x128xf32> to vector<8x128xf32>
    %128 = arith.mulf %127, %126 : vector<8x128xf32>
    %129 = arith.addf %124, %128 : vector<8x128xf32>
    %130 = vector.extract_strided_slice %1 {offsets = [23, 0], sizes = [1, 128], strides = [1, 1]} : vector<26x128xf32> to vector<1x128xf32>
    %131 = vector.extract_strided_slice %114 {offsets = [3, 0], sizes = [8, 128], strides = [1, 1]} : vector<13x128xf32> to vector<8x128xf32>
    %132 = vector.broadcast %130 : vector<1x128xf32> to vector<8x128xf32>
    %133 = arith.mulf %132, %131 : vector<8x128xf32>
    %134 = arith.addf %129, %133 : vector<8x128xf32>
    %135 = vector.extract_strided_slice %1 {offsets = [24, 0], sizes = [1, 128], strides = [1, 1]} : vector<26x128xf32> to vector<1x128xf32>
    %136 = vector.extract_strided_slice %114 {offsets = [4, 0], sizes = [8, 128], strides = [1, 1]} : vector<13x128xf32> to vector<8x128xf32>
    %137 = vector.broadcast %135 : vector<1x128xf32> to vector<8x128xf32>
    %138 = arith.mulf %137, %136 : vector<8x128xf32>
    %139 = arith.addf %134, %138 : vector<8x128xf32>
    %c0_13 = arith.constant 0 : index
    %c0_14 = arith.constant 0 : index
    %140 = vector.load %arg3[%c0_13, %c0_14] : memref<8x128xf32, #tpu.memory_space<vmem>>, vector<8x128xf32>
    tpu.vector_store %arg3[%c0_13, %c0_14], %139 {strides = array<i32>} : memref<8x128xf32, #tpu.memory_space<vmem>>, vector<8x128xf32>,
    %c1_15 = arith.constant 1 : index
    %c0_16 = arith.constant 0 : index
    %c0_17 = arith.constant 0 : index
    %141 = vector.load %arg2[%c1_15, %c0_16, %c0_17] : memref<2x26x128xf32, #tpu.memory_space<vmem>>, vector<1x26x128xf32>
    %142 = vector.shape_cast %141 : vector<1x26x128xf32> to vector<26x128xf32>
    %143 = vector.extract_strided_slice %142 {offsets = [25, 0], sizes = [1, 128], strides = [1, 1]} : vector<26x128xf32> to vector<1x128xf32>
    %144 = vector.shape_cast %143 : vector<1x128xf32> to vector<1x128xf32>
    %145 = vector.broadcast %144 : vector<1x128xf32> to vector<8x128xf32>
    %c1_18 = arith.constant 1 : index
    %c0_19 = arith.constant 0 : index
    %c0_20 = arith.constant 0 : index
    %146 = vector.load %arg1[%c1_18, %c0_19, %c0_20] : memref<6x13x128xf32, #tpu.memory_space<vmem>>, vector<1x13x128xf32>
    %147 = vector.shape_cast %146 : vector<1x13x128xf32> to vector<13x128xf32>
    %148 = vector.extract_strided_slice %142 {offsets = [0, 0], sizes = [1, 128], strides = [1, 1]} : vector<26x128xf32> to vector<1x128xf32>
    %149 = vector.extract_strided_slice %147 {offsets = [0, 0], sizes = [8, 128], strides = [1, 1]} : vector<13x128xf32> to vector<8x128xf32>
    %150 = vector.broadcast %148 : vector<1x128xf32> to vector<8x128xf32>
    %151 = arith.mulf %150, %149 : vector<8x128xf32>
    %152 = arith.addf %145, %151 : vector<8x128xf32>
    %153 = vector.extract_strided_slice %142 {offsets = [1, 0], sizes = [1, 128], strides = [1, 1]} : vector<26x128xf32> to vector<1x128xf32>
    %154 = vector.extract_strided_slice %147 {offsets = [1, 0], sizes = [8, 128], strides = [1, 1]} : vector<13x128xf32> to vector<8x128xf32>
    %155 = vector.broadcast %153 : vector<1x128xf32> to vector<8x128xf32>
    %156 = arith.mulf %155, %154 : vector<8x128xf32>
    %157 = arith.addf %152, %156 : vector<8x128xf32>
    %158 = vector.extract_strided_slice %142 {offsets = [2, 0], sizes = [1, 128], strides = [1, 1]} : vector<26x128xf32> to vector<1x128xf32>
    %159 = vector.extract_strided_slice %147 {offsets = [2, 0], sizes = [8, 128], strides = [1, 1]} : vector<13x128xf32> to vector<8x128xf32>
    %160 = vector.broadcast %158 : vector<1x128xf32> to vector<8x128xf32>
    %161 = arith.mulf %160, %159 : vector<8x128xf32>
    %162 = arith.addf %157, %161 : vector<8x128xf32>
    %163 = vector.extract_strided_slice %142 {offsets = [3, 0], sizes = [1, 128], strides = [1, 1]} : vector<26x128xf32> to vector<1x128xf32>
    %164 = vector.extract_strided_slice %147 {offsets = [3, 0], sizes = [8, 128], strides = [1, 1]} : vector<13x128xf32> to vector<8x128xf32>
    %165 = vector.broadcast %163 : vector<1x128xf32> to vector<8x128xf32>
    %166 = arith.mulf %165, %164 : vector<8x128xf32>
    %167 = arith.addf %162, %166 : vector<8x128xf32>
    %168 = vector.extract_strided_slice %142 {offsets = [4, 0], sizes = [1, 128], strides = [1, 1]} : vector<26x128xf32> to vector<1x128xf32>
    %169 = vector.extract_strided_slice %147 {offsets = [4, 0], sizes = [8, 128], strides = [1, 1]} : vector<13x128xf32> to vector<8x128xf32>
    %170 = vector.broadcast %168 : vector<1x128xf32> to vector<8x128xf32>
    %171 = arith.mulf %170, %169 : vector<8x128xf32>
    %172 = arith.addf %167, %171 : vector<8x128xf32>
    %c2_21 = arith.constant 2 : index
    %c0_22 = arith.constant 0 : index
    %c0_23 = arith.constant 0 : index
    %173 = vector.load %arg1[%c2_21, %c0_22, %c0_23] : memref<6x13x128xf32, #tpu.memory_space<vmem>>, vector<1x13x128xf32>
    %174 = vector.shape_cast %173 : vector<1x13x128xf32> to vector<13x128xf32>
    %175 = vector.extract_strided_slice %142 {offsets = [5, 0], sizes = [1, 128], strides = [1, 1]} : vector<26x128xf32> to vector<1x128xf32>
    %176 = vector.extract_strided_slice %174 {offsets = [0, 0], sizes = [8, 128], strides = [1, 1]} : vector<13x128xf32> to vector<8x128xf32>
    %177 = vector.broadcast %175 : vector<1x128xf32> to vector<8x128xf32>
    %178 = arith.mulf %177, %176 : vector<8x128xf32>
    %179 = arith.addf %172, %178 : vector<8x128xf32>
    %180 = vector.extract_strided_slice %142 {offsets = [6, 0], sizes = [1, 128], strides = [1, 1]} : vector<26x128xf32> to vector<1x128xf32>
    %181 = vector.extract_strided_slice %174 {offsets = [1, 0], sizes = [8, 128], strides = [1, 1]} : vector<13x128xf32> to vector<8x128xf32>
    %182 = vector.broadcast %180 : vector<1x128xf32> to vector<8x128xf32>
    %183 = arith.mulf %182, %181 : vector<8x128xf32>
    %184 = arith.addf %179, %183 : vector<8x128xf32>
    %185 = vector.extract_strided_slice %142 {offsets = [7, 0], sizes = [1, 128], strides = [1, 1]} : vector<26x128xf32> to vector<1x128xf32>
    %186 = vector.extract_strided_slice %174 {offsets = [2, 0], sizes = [8, 128], strides = [1, 1]} : vector<13x128xf32> to vector<8x128xf32>
    %187 = vector.broadcast %185 : vector<1x128xf32> to vector<8x128xf32>
    %188 = arith.mulf %187, %186 : vector<8x128xf32>
    %189 = arith.addf %184, %188 : vector<8x128xf32>
    %190 = vector.extract_strided_slice %142 {offsets = [8, 0], sizes = [1, 128], strides = [1, 1]} : vector<26x128xf32> to vector<1x128xf32>
    %191 = vector.extract_strided_slice %174 {offsets = [3, 0], sizes = [8, 128], strides = [1, 1]} : vector<13x128xf32> to vector<8x128xf32>
    %192 = vector.broadcast %190 : vector<1x128xf32> to vector<8x128xf32>
    %193 = arith.mulf %192, %191 : vector<8x128xf32>
    %194 = arith.addf %189, %193 : vector<8x128xf32>
    %195 = vector.extract_strided_slice %142 {offsets = [9, 0], sizes = [1, 128], strides = [1, 1]} : vector<26x128xf32> to vector<1x128xf32>
    %196 = vector.extract_strided_slice %174 {offsets = [4, 0], sizes = [8, 128], strides = [1, 1]} : vector<13x128xf32> to vector<8x128xf32>
    %197 = vector.broadcast %195 : vector<1x128xf32> to vector<8x128xf32>
    %198 = arith.mulf %197, %196 : vector<8x128xf32>
    %199 = arith.addf %194, %198 : vector<8x128xf32>
    %c3_24 = arith.constant 3 : index
    %c0_25 = arith.constant 0 : index
    %c0_26 = arith.constant 0 : index
    %200 = vector.load %arg1[%c3_24, %c0_25, %c0_26] : memref<6x13x128xf32, #tpu.memory_space<vmem>>, vector<1x13x128xf32>
    %201 = vector.shape_cast %200 : vector<1x13x128xf32> to vector<13x128xf32>
    %202 = vector.extract_strided_slice %142 {offsets = [10, 0], sizes = [1, 128], strides = [1, 1]} : vector<26x128xf32> to vector<1x128xf32>
    %203 = vector.extract_strided_slice %201 {offsets = [0, 0], sizes = [8, 128], strides = [1, 1]} : vector<13x128xf32> to vector<8x128xf32>
    %204 = vector.broadcast %202 : vector<1x128xf32> to vector<8x128xf32>
    %205 = arith.mulf %204, %203 : vector<8x128xf32>
    %206 = arith.addf %199, %205 : vector<8x128xf32>
    %207 = vector.extract_strided_slice %142 {offsets = [11, 0], sizes = [1, 128], strides = [1, 1]} : vector<26x128xf32> to vector<1x128xf32>
    %208 = vector.extract_strided_slice %201 {offsets = [1, 0], sizes = [8, 128], strides = [1, 1]} : vector<13x128xf32> to vector<8x128xf32>
    %209 = vector.broadcast %207 : vector<1x128xf32> to vector<8x128xf32>
    %210 = arith.mulf %209, %208 : vector<8x128xf32>
    %211 = arith.addf %206, %210 : vector<8x128xf32>
    %212 = vector.extract_strided_slice %142 {offsets = [12, 0], sizes = [1, 128], strides = [1, 1]} : vector<26x128xf32> to vector<1x128xf32>
    %213 = vector.extract_strided_slice %201 {offsets = [2, 0], sizes = [8, 128], strides = [1, 1]} : vector<13x128xf32> to vector<8x128xf32>
    %214 = vector.broadcast %212 : vector<1x128xf32> to vector<8x128xf32>
    %215 = arith.mulf %214, %213 : vector<8x128xf32>
    %216 = arith.addf %211, %215 : vector<8x128xf32>
    %217 = vector.extract_strided_slice %142 {offsets = [13, 0], sizes = [1, 128], strides = [1, 1]} : vector<26x128xf32> to vector<1x128xf32>
    %218 = vector.extract_strided_slice %201 {offsets = [3, 0], sizes = [8, 128], strides = [1, 1]} : vector<13x128xf32> to vector<8x128xf32>
    %219 = vector.broadcast %217 : vector<1x128xf32> to vector<8x128xf32>
    %220 = arith.mulf %219, %218 : vector<8x128xf32>
    %221 = arith.addf %216, %220 : vector<8x128xf32>
    %222 = vector.extract_strided_slice %142 {offsets = [14, 0], sizes = [1, 128], strides = [1, 1]} : vector<26x128xf32> to vector<1x128xf32>
    %223 = vector.extract_strided_slice %201 {offsets = [4, 0], sizes = [8, 128], strides = [1, 1]} : vector<13x128xf32> to vector<8x128xf32>
    %224 = vector.broadcast %222 : vector<1x128xf32> to vector<8x128xf32>
    %225 = arith.mulf %224, %223 : vector<8x128xf32>
    %226 = arith.addf %221, %225 : vector<8x128xf32>
    %c4_27 = arith.constant 4 : index
    %c0_28 = arith.constant 0 : index
    %c0_29 = arith.constant 0 : index
    %227 = vector.load %arg1[%c4_27, %c0_28, %c0_29] : memref<6x13x128xf32, #tpu.memory_space<vmem>>, vector<1x13x128xf32>
    %228 = vector.shape_cast %227 : vector<1x13x128xf32> to vector<13x128xf32>
    %229 = vector.extract_strided_slice %142 {offsets = [15, 0], sizes = [1, 128], strides = [1, 1]} : vector<26x128xf32> to vector<1x128xf32>
    %230 = vector.extract_strided_slice %228 {offsets = [0, 0], sizes = [8, 128], strides = [1, 1]} : vector<13x128xf32> to vector<8x128xf32>
    %231 = vector.broadcast %229 : vector<1x128xf32> to vector<8x128xf32>
    %232 = arith.mulf %231, %230 : vector<8x128xf32>
    %233 = arith.addf %226, %232 : vector<8x128xf32>
    %234 = vector.extract_strided_slice %142 {offsets = [16, 0], sizes = [1, 128], strides = [1, 1]} : vector<26x128xf32> to vector<1x128xf32>
    %235 = vector.extract_strided_slice %228 {offsets = [1, 0], sizes = [8, 128], strides = [1, 1]} : vector<13x128xf32> to vector<8x128xf32>
    %236 = vector.broadcast %234 : vector<1x128xf32> to vector<8x128xf32>
    %237 = arith.mulf %236, %235 : vector<8x128xf32>
    %238 = arith.addf %233, %237 : vector<8x128xf32>
    %239 = vector.extract_strided_slice %142 {offsets = [17, 0], sizes = [1, 128], strides = [1, 1]} : vector<26x128xf32> to vector<1x128xf32>
    %240 = vector.extract_strided_slice %228 {offsets = [2, 0], sizes = [8, 128], strides = [1, 1]} : vector<13x128xf32> to vector<8x128xf32>
    %241 = vector.broadcast %239 : vector<1x128xf32> to vector<8x128xf32>
    %242 = arith.mulf %241, %240 : vector<8x128xf32>
    %243 = arith.addf %238, %242 : vector<8x128xf32>
    %244 = vector.extract_strided_slice %142 {offsets = [18, 0], sizes = [1, 128], strides = [1, 1]} : vector<26x128xf32> to vector<1x128xf32>
    %245 = vector.extract_strided_slice %228 {offsets = [3, 0], sizes = [8, 128], strides = [1, 1]} : vector<13x128xf32> to vector<8x128xf32>
    %246 = vector.broadcast %244 : vector<1x128xf32> to vector<8x128xf32>
    %247 = arith.mulf %246, %245 : vector<8x128xf32>
    %248 = arith.addf %243, %247 : vector<8x128xf32>
    %249 = vector.extract_strided_slice %142 {offsets = [19, 0], sizes = [1, 128], strides = [1, 1]} : vector<26x128xf32> to vector<1x128xf32>
    %250 = vector.extract_strided_slice %228 {offsets = [4, 0], sizes = [8, 128], strides = [1, 1]} : vector<13x128xf32> to vector<8x128xf32>
    %251 = vector.broadcast %249 : vector<1x128xf32> to vector<8x128xf32>
    %252 = arith.mulf %251, %250 : vector<8x128xf32>
    %253 = arith.addf %248, %252 : vector<8x128xf32>
    %c5 = arith.constant 5 : index
    %c0_30 = arith.constant 0 : index
    %c0_31 = arith.constant 0 : index
    %254 = vector.load %arg1[%c5, %c0_30, %c0_31] : memref<6x13x128xf32, #tpu.memory_space<vmem>>, vector<1x13x128xf32>
    %255 = vector.shape_cast %254 : vector<1x13x128xf32> to vector<13x128xf32>
    %256 = vector.extract_strided_slice %142 {offsets = [20, 0], sizes = [1, 128], strides = [1, 1]} : vector<26x128xf32> to vector<1x128xf32>
    %257 = vector.extract_strided_slice %255 {offsets = [0, 0], sizes = [8, 128], strides = [1, 1]} : vector<13x128xf32> to vector<8x128xf32>
    %258 = vector.broadcast %256 : vector<1x128xf32> to vector<8x128xf32>
    %259 = arith.mulf %258, %257 : vector<8x128xf32>
    %260 = arith.addf %253, %259 : vector<8x128xf32>
    %261 = vector.extract_strided_slice %142 {offsets = [21, 0], sizes = [1, 128], strides = [1, 1]} : vector<26x128xf32> to vector<1x128xf32>
    %262 = vector.extract_strided_slice %255 {offsets = [1, 0], sizes = [8, 128], strides = [1, 1]} : vector<13x128xf32> to vector<8x128xf32>
    %263 = vector.broadcast %261 : vector<1x128xf32> to vector<8x128xf32>
    %264 = arith.mulf %263, %262 : vector<8x128xf32>
    %265 = arith.addf %260, %264 : vector<8x128xf32>
    %266 = vector.extract_strided_slice %142 {offsets = [22, 0], sizes = [1, 128], strides = [1, 1]} : vector<26x128xf32> to vector<1x128xf32>
    %267 = vector.extract_strided_slice %255 {offsets = [2, 0], sizes = [8, 128], strides = [1, 1]} : vector<13x128xf32> to vector<8x128xf32>
    %268 = vector.broadcast %266 : vector<1x128xf32> to vector<8x128xf32>
    %269 = arith.mulf %268, %267 : vector<8x128xf32>
    %270 = arith.addf %265, %269 : vector<8x128xf32>
    %271 = vector.extract_strided_slice %142 {offsets = [23, 0], sizes = [1, 128], strides = [1, 1]} : vector<26x128xf32> to vector<1x128xf32>
    %272 = vector.extract_strided_slice %255 {offsets = [3, 0], sizes = [8, 128], strides = [1, 1]} : vector<13x128xf32> to vector<8x128xf32>
    %273 = vector.broadcast %271 : vector<1x128xf32> to vector<8x128xf32>
    %274 = arith.mulf %273, %272 : vector<8x128xf32>
    %275 = arith.addf %270, %274 : vector<8x128xf32>
    %276 = vector.extract_strided_slice %142 {offsets = [24, 0], sizes = [1, 128], strides = [1, 1]} : vector<26x128xf32> to vector<1x128xf32>
    %277 = vector.extract_strided_slice %255 {offsets = [4, 0], sizes = [8, 128], strides = [1, 1]} : vector<13x128xf32> to vector<8x128xf32>
    %278 = vector.broadcast %276 : vector<1x128xf32> to vector<8x128xf32>
    %279 = arith.mulf %278, %277 : vector<8x128xf32>
    %280 = arith.addf %275, %279 : vector<8x128xf32>
    %cst = arith.constant 5.000000e-01 : f32
    %281 = vector.broadcast %cst : f32 to vector<8x128xf32>
    %282 = arith.mulf %281, %280 : vector<8x128xf32>
    %283 = math.exp %282 : vector<8x128xf32>
    %c0_32 = arith.constant 0 : index
    %c0_33 = arith.constant 0 : index
    %284 = vector.load %arg4[%c0_32, %c0_33] : memref<8x128xf32, #tpu.memory_space<vmem>>, vector<8x128xf32>
    tpu.vector_store %arg4[%c0_32, %c0_33], %283 {strides = array<i32>} : memref<8x128xf32, #tpu.memory_space<vmem>>, vector<8x128xf32>,
    return
  }
  func.func @transform_0(%arg0: i32) -> (i32, i32, i32) {
    %c0_i32 = arith.constant 0 : i32
    %c0_i32_0 = arith.constant 0 : i32
    %c0_i32_1 = arith.constant 0 : i32
    return %c0_i32, %c0_i32_0, %arg0 : i32, i32, i32
  }
  func.func @transform_1(%arg0: i32) -> (i32, i32, i32) {
    %c0_i32 = arith.constant 0 : i32
    %c0_i32_0 = arith.constant 0 : i32
    %c0_i32_1 = arith.constant 0 : i32
    return %c0_i32, %c0_i32_0, %arg0 : i32, i32, i32
  }
  func.func @transform_2(%arg0: i32) -> (i32, i32) {
    %c0_i32 = arith.constant 0 : i32
    %c0_i32_0 = arith.constant 0 : i32
    return %c0_i32, %arg0 : i32, i32
  }
  func.func @transform_3(%arg0: i32) -> (i32, i32) {
    %c0_i32 = arith.constant 0 : i32
    %c0_i32_0 = arith.constant 0 : i32
    return %c0_i32, %arg0 : i32, i32
  }
}

</mosaic_0001>

<llo_original>
// kernel: network_freq_forward.1
$region0: #{network_freq_forward.1}
  #allocation0 [shape = 'u32[]', space=smem, size = 0x4, offset = 0x4, fixed_abs, tag = 'smem constant byte address 0x4 - core index']
  #allocation1 [shape = 'u32[144,128]{1,0:T(1,128)}', space=vmem, size = 0x12000, scoped, tag = 'internal scratch']
  %s0 = inlined_call_operand.vmem [shape: f32[6,13,128], index: 0, kind: input, shape index: {}]
  %s1 = inlined_call_operand.vmem [shape: f32[2,26,128], index: 1, kind: input, shape index: {}]
  %s2 = inlined_call_operand.vmem [shape: f32[8,128], index: 2, kind: output, shape index: {0}]
  %s3 = inlined_call_operand.vmem [shape: f32[8,128], index: 3, kind: output, shape index: {1}]
  %4 = xla_tuple %s2, %s3
  %s5 = sld [smem:[#allocation0]]
  $region26: #{network_freq_forward.1} parent=0
    _
  %s7 = ssub.s32 1, %s5
  %s8 = scalar_select 0, %s7, %s5
  // Predicated region
  $region2: #{network_freq_forward.1} parent=0 // pred_check
    _
  $region3: #{network_freq_forward.1} parent=0 // pred_check_branch
    %10 = sbr.rel (0) target = $region5
  $region4: #{network_freq_forward.1} parent=0 // pred_region
    _
  $region5: #{network_freq_forward.1} parent=0 // pred_fallthru
    _
  // Predicated region
  $region6: #{network_freq_forward.1} parent=0 // pred_check
    _
  $region7: #{network_freq_forward.1} parent=0 // pred_check_branch
    %12 = sbr.rel (0) target = $region9
  $region8: #{network_freq_forward.1} parent=0 // pred_region
    _
  $region9: #{network_freq_forward.1} parent=0 // pred_fallthru
    _
  %v13 = vld [vmem:[%s1] sm:$0xff]
  %v14 = vld [vmem:[%s1 + $0x8] sm:$0xff]
  %v15 = vld [vmem:[%s1 + $0x10] sm:$0xff]
  %v16 = vld [vmem:[%s1 + $0x18] sm:$0x3]
  %v17 = vlaneseq
  %v18 = vshrl.u32 %v17, 7
  %v19 = vsub.s32 1, %v18
  %v20 = vrot.slane %v16, %v19
  %v21 = vld [vmem:[%s0] sm:$0xff]
  %v22 = vld [vmem:[%s0 + $0x8] sm:$0x1f]
  %v23 = vlaneseq
  %v24 = vshrl.u32 %v23, 7
  %v25 = vsub.s32 0, %v24
  %v26 = vrot.slane %v13, %v25
  %v27 = vmul.f32 %v26, %v21
  %v28 = vadd.f32 %v20, %v27
  %v29 = vlaneseq
  %v30 = vshrl.u32 %v29, 7
  %v31 = vsub.s32 1, %v30
  %v32 = vrot.slane %v13, %v31
  %v33 = vmul.f32 %v32, %v21
  %v34 = vmul.f32 %v32, %v22
  %vm37 = vcmask 1046528
  %v38 = vrot.slane %v33, 1
  %v39 = vrot.slane %v34, 1
  %v40 = vsel %vm37, %v38, %v39
  %v42 = vadd.f32 %v28, %v40
  %v43 = vlaneseq
  %v44 = vshrl.u32 %v43, 7
  %v45 = vsub.s32 2, %v44
  %v46 = vrot.slane %v13, %v45
  %v47 = vmul.f32 %v46, %v21
  %v48 = vmul.f32 %v46, %v22
  %vm51 = vcmask 1045504
  %v52 = vrot.slane %v47, 2
  %v53 = vrot.slane %v48, 2
  %v54 = vsel %vm51, %v52, %v53
  %v56 = vadd.f32 %v42, %v54
  %v57 = vlaneseq
  %v58 = vshrl.u32 %v57, 7
  %v59 = vsub.s32 3, %v58
  %v60 = vrot.slane %v13, %v59
  %v61 = vmul.f32 %v60, %v21
  %v62 = vmul.f32 %v60, %v22
  %vm65 = vcmask 1044480
  %v66 = vrot.slane %v61, 3
  %v67 = vrot.slane %v62, 3
  %v68 = vsel %vm65, %v66, %v67
  %v70 = vadd.f32 %v56, %v68
  %v71 = vlaneseq
  %v72 = vshrl.u32 %v71, 7
  %v73 = vsub.s32 4, %v72
  %v74 = vrot.slane %v13, %v73
  %v75 = vmul.f32 %v74, %v21
  %v76 = vmul.f32 %v74, %v22
  %vm79 = vcmask 1043456
  %v80 = vrot.slane %v75, 4
  %v81 = vrot.slane %v76, 4
  %v82 = vsel %vm79, %v80, %v81
  %v84 = vadd.f32 %v70, %v82
  %s85 = scalar_lea.vmem %s0, 16
  %v86 = vld [vmem:[%s85] sm:$0xff]
  %v87 = vld [vmem:[%s85 + $0x8] sm:$0x1f]
  %v88 = vlaneseq
  %v89 = vshrl.u32 %v88, 7
  %v90 = vsub.s32 5, %v89
  %v91 = vrot.slane %v13, %v90
  %v92 = vmul.f32 %v91, %v86
  %v93 = vadd.f32 %v84, %v92
  %v94 = vlaneseq
  %v95 = vshrl.u32 %v94, 7
  %v96 = vsub.s32 6, %v95
  %v97 = vrot.slane %v13, %v96
  %v98 = vmul.f32 %v97, %v86
  %v99 = vmul.f32 %v97, %v87
  %v102 = vrot.slane %v98, 1
  %v103 = vrot.slane %v99, 1
  %v104 = vsel %vm37, %v102, %v103
  %v106 = vadd.f32 %v93, %v104
  %v107 = vlaneseq
  %v108 = vshrl.u32 %v107, 7
  %v109 = vsub.s32 7, %v108
  %v110 = vrot.slane %v13, %v109
  %v111 = vmul.f32 %v110, %v86
  %v112 = vmul.f32 %v110, %v87
  %v115 = vrot.slane %v111, 2
  %v116 = vrot.slane %v112, 2
  %v117 = vsel %vm51, %v115, %v116
  %v119 = vadd.f32 %v106, %v117
  %v120 = vlaneseq
  %v121 = vshrl.u32 %v120, 7
  %v122 = vsub.s32 0, %v121
  %v123 = vrot.slane %v14, %v122
  %v124 = vmul.f32 %v123, %v86
  %v125 = vmul.f32 %v123, %v87
  %v128 = vrot.slane %v124, 3
  %v129 = vrot.slane %v125, 3
  %v130 = vsel %vm65, %v128, %v129
  %v132 = vadd.f32 %v119, %v130
  %v133 = vlaneseq
  %v134 = vshrl.u32 %v133, 7
  %v135 = vsub.s32 1, %v134
  %v136 = vrot.slane %v14, %v135
  %v137 = vmul.f32 %v136, %v86
  %v138 = vmul.f32 %v136, %v87
  %v141 = vrot.slane %v137, 4
  %v142 = vrot.slane %v138, 4
  %v143 = vsel %vm79, %v141, %v142
  %v145 = vadd.f32 %v132, %v143
  %s146 = scalar_lea.vmem %s0, 32
  %v147 = vld [vmem:[%s146] sm:$0xff]
  %v148 = vld [vmem:[%s146 + $0x8] sm:$0x1f]
  %v149 = vlaneseq
  %v150 = vshrl.u32 %v149, 7
  %v151 = vsub.s32 2, %v150
  %v152 = vrot.slane %v14, %v151
  %v153 = vmul.f32 %v152, %v147
  %v154 = vadd.f32 %v145, %v153
  %v155 = vlaneseq
  %v156 = vshrl.u32 %v155, 7
  %v157 = vsub.s32 3, %v156
  %v158 = vrot.slane %v14, %v157
  %v159 = vmul.f32 %v158, %v147
  %v160 = vmul.f32 %v158, %v148
  %v163 = vrot.slane %v159, 1
  %v164 = vrot.slane %v160, 1
  %v165 = vsel %vm37, %v163, %v164
  %v167 = vadd.f32 %v154, %v165
  %v168 = vlaneseq
  %v169 = vshrl.u32 %v168, 7
  %v170 = vsub.s32 4, %v169
  %v171 = vrot.slane %v14, %v170
  %v172 = vmul.f32 %v171, %v147
  %v173 = vmul.f32 %v171, %v148
  %v176 = vrot.slane %v172, 2
  %v177 = vrot.slane %v173, 2
  %v178 = vsel %vm51, %v176, %v177
  %v180 = vadd.f32 %v167, %v178
  %v181 = vlaneseq
  %v182 = vshrl.u32 %v181, 7
  %v183 = vsub.s32 5, %v182
  %v184 = vrot.slane %v14, %v183
  %v185 = vmul.f32 %v184, %v147
  %v186 = vmul.f32 %v184, %v148
  %v189 = vrot.slane %v185, 3
  %v190 = vrot.slane %v186, 3
  %v191 = vsel %vm65, %v189, %v190
  %v193 = vadd.f32 %v180, %v191
  %v194 = vlaneseq
  %v195 = vshrl.u32 %v194, 7
  %v196 = vsub.s32 6, %v195
  %v197 = vrot.slane %v14, %v196
  %v198 = vmul.f32 %v197, %v147
  %v199 = vmul.f32 %v197, %v148
  %v202 = vrot.slane %v198, 4
  %v203 = vrot.slane %v199, 4
  %v204 = vsel %vm79, %v202, %v203
  %v206 = vadd.f32 %v193, %v204
  %s207 = scalar_lea.vmem %s0, 48
  %v208 = vld [vmem:[%s207] sm:$0xff]
  %v209 = vld [vmem:[%s207 + $0x8] sm:$0x1f]
  %v210 = vlaneseq
  %v211 = vshrl.u32 %v210, 7
  %v212 = vsub.s32 7, %v211
  %v213 = vrot.slane %v14, %v212
  %v214 = vmul.f32 %v213, %v208
  %v215 = vadd.f32 %v206, %v214
  %v216 = vlaneseq
  %v217 = vshrl.u32 %v216, 7
  %v218 = vsub.s32 0, %v217
  %v219 = vrot.slane %v15, %v218
  %v220 = vmul.f32 %v219, %v208
  %v221 = vmul.f32 %v219, %v209
  %v224 = vrot.slane %v220, 1
  %v225 = vrot.slane %v221, 1
  %v226 = vsel %vm37, %v224, %v225
  %v228 = vadd.f32 %v215, %v226
  %v229 = vlaneseq
  %v230 = vshrl.u32 %v229, 7
  %v231 = vsub.s32 1, %v230
  %v232 = vrot.slane %v15, %v231
  %v233 = vmul.f32 %v232, %v208
  %v234 = vmul.f32 %v232, %v209
  %v237 = vrot.slane %v233, 2
  %v238 = vrot.slane %v234, 2
  %v239 = vsel %vm51, %v237, %v238
  %v241 = vadd.f32 %v228, %v239
  %v242 = vlaneseq
  %v243 = vshrl.u32 %v242, 7
  %v244 = vsub.s32 2, %v243
  %v245 = vrot.slane %v15, %v244
  %v246 = vmul.f32 %v245, %v208
  %v247 = vmul.f32 %v245, %v209
  %v250 = vrot.slane %v246, 3
  %v251 = vrot.slane %v247, 3
  %v252 = vsel %vm65, %v250, %v251
  %v254 = vadd.f32 %v241, %v252
  %v255 = vlaneseq
  %v256 = vshrl.u32 %v255, 7
  %v257 = vsub.s32 3, %v256
  %v258 = vrot.slane %v15, %v257
  %v259 = vmul.f32 %v258, %v208
  %v260 = vmul.f32 %v258, %v209
  %v263 = vrot.slane %v259, 4
  %v264 = vrot.slane %v260, 4
  %v265 = vsel %vm79, %v263, %v264
  %v267 = vadd.f32 %v254, %v265
  %s268 = scalar_lea.vmem %s0, 64
  %v269 = vld [vmem:[%s268] sm:$0xff]
  %v270 = vld [vmem:[%s268 + $0x8] sm:$0x1f]
  %v271 = vlaneseq
  %v272 = vshrl.u32 %v271, 7
  %v273 = vsub.s32 4, %v272
  %v274 = vrot.slane %v15, %v273
  %v275 = vmul.f32 %v274, %v269
  %v276 = vadd.f32 %v267, %v275
  %v277 = vlaneseq
  %v278 = vshrl.u32 %v277, 7
  %v279 = vsub.s32 5, %v278
  %v280 = vrot.slane %v15, %v279
  %v281 = vmul.f32 %v280, %v269
  %v282 = vmul.f32 %v280, %v270
  %v285 = vrot.slane %v281, 1
  %v286 = vrot.slane %v282, 1
  %v287 = vsel %vm37, %v285, %v286
  %v289 = vadd.f32 %v276, %v287
  %v290 = vlaneseq
  %v291 = vshrl.u32 %v290, 7
  %v292 = vsub.s32 6, %v291
  %v293 = vrot.slane %v15, %v292
  %v294 = vmul.f32 %v293, %v269
  %v295 = vmul.f32 %v293, %v270
  %v298 = vrot.slane %v294, 2
  %v299 = vrot.slane %v295, 2
  %v300 = vsel %vm51, %v298, %v299
  %v302 = vadd.f32 %v289, %v300
  %v303 = vlaneseq
  %v304 = vshrl.u32 %v303, 7
  %v305 = vsub.s32 7, %v304
  %v306 = vrot.slane %v15, %v305
  %v307 = vmul.f32 %v306, %v269
  %v308 = vmul.f32 %v306, %v270
  %v311 = vrot.slane %v307, 3
  %v312 = vrot.slane %v308, 3
  %v313 = vsel %vm65, %v311, %v312
  %v315 = vadd.f32 %v302, %v313
  %v316 = vlaneseq
  %v317 = vshrl.u32 %v316, 7
  %v318 = vsub.s32 0, %v317
  %v319 = vrot.slane %v16, %v318
  %v320 = vmul.f32 %v319, %v269
  %v321 = vmul.f32 %v319, %v270
  %v324 = vrot.slane %v320, 4
  %v325 = vrot.slane %v321, 4
  %v326 = vsel %vm79, %v324, %v325
  %v328 = vadd.f32 %v315, %v326
  %329 = vst [vmem:[%s2] sm:$0xff] %v328
  %s330 = scalar_lea.vmem %s1, 32
  %v331 = vld [vmem:[%s330] sm:$0xff]
  %v332 = vld [vmem:[%s330 + $0x8] sm:$0xff]
  %v333 = vld [vmem:[%s330 + $0x10] sm:$0xff]
  %v334 = vld [vmem:[%s330 + $0x18] sm:$0x3]
  %v335 = vlaneseq
  %v336 = vshrl.u32 %v335, 7
  %v337 = vsub.s32 1, %v336
  %v338 = vrot.slane %v334, %v337
  %v339 = vld [vmem:[%s85] sm:$0xff]
  %v340 = vld [vmem:[%s85 + $0x8] sm:$0x1f]
  %v341 = vlaneseq
  %v342 = vshrl.u32 %v341, 7
  %v343 = vsub.s32 0, %v342
  %v344 = vrot.slane %v331, %v343
  %v345 = vmul.f32 %v344, %v339
  %v346 = vadd.f32 %v338, %v345
  %v347 = vlaneseq
  %v348 = vshrl.u32 %v347, 7
  %v349 = vsub.s32 1, %v348
  %v350 = vrot.slane %v331, %v349
  %v351 = vmul.f32 %v350, %v339
  %v352 = vmul.f32 %v350, %v340
  %v355 = vrot.slane %v351, 1
  %v356 = vrot.slane %v352, 1
  %v357 = vsel %vm37, %v355, %v356
  %v359 = vadd.f32 %v346, %v357
  %v360 = vlaneseq
  %v361 = vshrl.u32 %v360, 7
  %v362 = vsub.s32 2, %v361
  %v363 = vrot.slane %v331, %v362
  %v364 = vmul.f32 %v363, %v339
  %v365 = vmul.f32 %v363, %v340
  %v368 = vrot.slane %v364, 2
  %v369 = vrot.slane %v365, 2
  %v370 = vsel %vm51, %v368, %v369
  %v372 = vadd.f32 %v359, %v370
  %v373 = vlaneseq
  %v374 = vshrl.u32 %v373, 7
  %v375 = vsub.s32 3, %v374
  %v376 = vrot.slane %v331, %v375
  %v377 = vmul.f32 %v376, %v339
  %v378 = vmul.f32 %v376, %v340
  %v381 = vrot.slane %v377, 3
  %v382 = vrot.slane %v378, 3
  %v383 = vsel %vm65, %v381, %v382
  %v385 = vadd.f32 %v372, %v383
  %v386 = vlaneseq
  %v387 = vshrl.u32 %v386, 7
  %v388 = vsub.s32 4, %v387
  %v389 = vrot.slane %v331, %v388
  %v390 = vmul.f32 %v389, %v339
  %v391 = vmul.f32 %v389, %v340
  %v394 = vrot.slane %v390, 4
  %v395 = vrot.slane %v391, 4
  %v396 = vsel %vm79, %v394, %v395
  %v398 = vadd.f32 %v385, %v396
  %v399 = vld [vmem:[%s146] sm:$0xff]
  %v400 = vld [vmem:[%s146 + $0x8] sm:$0x1f]
  %v401 = vlaneseq
  %v402 = vshrl.u32 %v401, 7
  %v403 = vsub.s32 5, %v402
  %v404 = vrot.slane %v331, %v403
  %v405 = vmul.f32 %v404, %v399
  %v406 = vadd.f32 %v398, %v405
  %v407 = vlaneseq
  %v408 = vshrl.u32 %v407, 7
  %v409 = vsub.s32 6, %v408
  %v410 = vrot.slane %v331, %v409
  %v411 = vmul.f32 %v410, %v399
  %v412 = vmul.f32 %v410, %v400
  %v415 = vrot.slane %v411, 1
  %v416 = vrot.slane %v412, 1
  %v417 = vsel %vm37, %v415, %v416
  %v419 = vadd.f32 %v406, %v417
  %v420 = vlaneseq
  %v421 = vshrl.u32 %v420, 7
  %v422 = vsub.s32 7, %v421
  %v423 = vrot.slane %v331, %v422
  %v424 = vmul.f32 %v423, %v399
  %v425 = vmul.f32 %v423, %v400
  %v428 = vrot.slane %v424, 2
  %v429 = vrot.slane %v425, 2
  %v430 = vsel %vm51, %v428, %v429
  %v432 = vadd.f32 %v419, %v430
  %v433 = vlaneseq
  %v434 = vshrl.u32 %v433, 7
  %v435 = vsub.s32 0, %v434
  %v436 = vrot.slane %v332, %v435
  %v437 = vmul.f32 %v436, %v399
  %v438 = vmul.f32 %v436, %v400
  %v441 = vrot.slane %v437, 3
  %v442 = vrot.slane %v438, 3
  %v443 = vsel %vm65, %v441, %v442
  %v445 = vadd.f32 %v432, %v443
  %v446 = vlaneseq
  %v447 = vshrl.u32 %v446, 7
  %v448 = vsub.s32 1, %v447
  %v449 = vrot.slane %v332, %v448
  %v450 = vmul.f32 %v449, %v399
  %v451 = vmul.f32 %v449, %v400
  %v454 = vrot.slane %v450, 4
  %v455 = vrot.slane %v451, 4
  %v456 = vsel %vm79, %v454, %v455
  %v458 = vadd.f32 %v445, %v456
  %v459 = vld [vmem:[%s207] sm:$0xff]
  %v460 = vld [vmem:[%s207 + $0x8] sm:$0x1f]
  %v461 = vlaneseq
  %v462 = vshrl.u32 %v461, 7
  %v463 = vsub.s32 2, %v462
  %v464 = vrot.slane %v332, %v463
  %v465 = vmul.f32 %v464, %v459
  %v466 = vadd.f32 %v458, %v465
  %v467 = vlaneseq
  %v468 = vshrl.u32 %v467, 7
  %v469 = vsub.s32 3, %v468
  %v470 = vrot.slane %v332, %v469
  %v471 = vmul.f32 %v470, %v459
  %v472 = vmul.f32 %v470, %v460
  %v475 = vrot.slane %v471, 1
  %v476 = vrot.slane %v472, 1
  %v477 = vsel %vm37, %v475, %v476
  %v479 = vadd.f32 %v466, %v477
  %v480 = vlaneseq
  %v481 = vshrl.u32 %v480, 7
  %v482 = vsub.s32 4, %v481
  %v483 = vrot.slane %v332, %v482
  %v484 = vmul.f32 %v483, %v459
  %v485 = vmul.f32 %v483, %v460
  %v488 = vrot.slane %v484, 2
  %v489 = vrot.slane %v485, 2
  %v490 = vsel %vm51, %v488, %v489
  %v492 = vadd.f32 %v479, %v490
  %v493 = vlaneseq
  %v494 = vshrl.u32 %v493, 7
  %v495 = vsub.s32 5, %v494
  %v496 = vrot.slane %v332, %v495
  %v497 = vmul.f32 %v496, %v459
  %v498 = vmul.f32 %v496, %v460
  %v501 = vrot.slane %v497, 3
  %v502 = vrot.slane %v498, 3
  %v503 = vsel %vm65, %v501, %v502
  %v505 = vadd.f32 %v492, %v503
  %v506 = vlaneseq
  %v507 = vshrl.u32 %v506, 7
  %v508 = vsub.s32 6, %v507
  %v509 = vrot.slane %v332, %v508
  %v510 = vmul.f32 %v509, %v459
  %v511 = vmul.f32 %v509, %v460
  %v514 = vrot.slane %v510, 4
  %v515 = vrot.slane %v511, 4
  %v516 = vsel %vm79, %v514, %v515
  %v518 = vadd.f32 %v505, %v516
  %v519 = vld [vmem:[%s268] sm:$0xff]
  %v520 = vld [vmem:[%s268 + $0x8] sm:$0x1f]
  %v521 = vlaneseq
  %v522 = vshrl.u32 %v521, 7
  %v523 = vsub.s32 7, %v522
  %v524 = vrot.slane %v332, %v523
  %v525 = vmul.f32 %v524, %v519
  %v526 = vadd.f32 %v518, %v525
  %v527 = vlaneseq
  %v528 = vshrl.u32 %v527, 7
  %v529 = vsub.s32 0, %v528
  %v530 = vrot.slane %v333, %v529
  %v531 = vmul.f32 %v530, %v519
  %v532 = vmul.f32 %v530, %v520
  %v535 = vrot.slane %v531, 1
  %v536 = vrot.slane %v532, 1
  %v537 = vsel %vm37, %v535, %v536
  %v539 = vadd.f32 %v526, %v537
  %v540 = vlaneseq
  %v541 = vshrl.u32 %v540, 7
  %v542 = vsub.s32 1, %v541
  %v543 = vrot.slane %v333, %v542
  %v544 = vmul.f32 %v543, %v519
  %v545 = vmul.f32 %v543, %v520
  %v548 = vrot.slane %v544, 2
  %v549 = vrot.slane %v545, 2
  %v550 = vsel %vm51, %v548, %v549
  %v552 = vadd.f32 %v539, %v550
  %v553 = vlaneseq
  %v554 = vshrl.u32 %v553, 7
  %v555 = vsub.s32 2, %v554
  %v556 = vrot.slane %v333, %v555
  %v557 = vmul.f32 %v556, %v519
  %v558 = vmul.f32 %v556, %v520
  %v561 = vrot.slane %v557, 3
  %v562 = vrot.slane %v558, 3
  %v563 = vsel %vm65, %v561, %v562
  %v565 = vadd.f32 %v552, %v563
  %v566 = vlaneseq
  %v567 = vshrl.u32 %v566, 7
  %v568 = vsub.s32 3, %v567
  %v569 = vrot.slane %v333, %v568
  %v570 = vmul.f32 %v569, %v519
  %v571 = vmul.f32 %v569, %v520
  %v574 = vrot.slane %v570, 4
  %v575 = vrot.slane %v571, 4
  %v576 = vsel %vm79, %v574, %v575
  %v578 = vadd.f32 %v565, %v576
  %s579 = scalar_lea.vmem %s0, 80
  %v580 = vld [vmem:[%s579] sm:$0xff]
  %v581 = vld [vmem:[%s579 + $0x8] sm:$0x1f]
  %v582 = vlaneseq
  %v583 = vshrl.u32 %v582, 7
  %v584 = vsub.s32 4, %v583
  %v585 = vrot.slane %v333, %v584
  %v586 = vmul.f32 %v585, %v580
  %v587 = vadd.f32 %v578, %v586
  %v588 = vlaneseq
  %v589 = vshrl.u32 %v588, 7
  %v590 = vsub.s32 5, %v589
  %v591 = vrot.slane %v333, %v590
  %v592 = vmul.f32 %v591, %v580
  %v593 = vmul.f32 %v591, %v581
  %v596 = vrot.slane %v592, 1
  %v597 = vrot.slane %v593, 1
  %v598 = vsel %vm37, %v596, %v597
  %v600 = vadd.f32 %v587, %v598
  %v601 = vlaneseq
  %v602 = vshrl.u32 %v601, 7
  %v603 = vsub.s32 6, %v602
  %v604 = vrot.slane %v333, %v603
  %v605 = vmul.f32 %v604, %v580
  %v606 = vmul.f32 %v604, %v581
  %v609 = vrot.slane %v605, 2
  %v610 = vrot.slane %v606, 2
  %v611 = vsel %vm51, %v609, %v610
  %v613 = vadd.f32 %v600, %v611
  %v614 = vlaneseq
  %v615 = vshrl.u32 %v614, 7
  %v616 = vsub.s32 7, %v615
  %v617 = vrot.slane %v333, %v616
  %v618 = vmul.f32 %v617, %v580
  %v619 = vmul.f32 %v617, %v581
  %v622 = vrot.slane %v618, 3
  %v623 = vrot.slane %v619, 3
  %v624 = vsel %vm65, %v622, %v623
  %v626 = vadd.f32 %v613, %v624
  %v627 = vlaneseq
  %v628 = vshrl.u32 %v627, 7
  %v629 = vsub.s32 0, %v628
  %v630 = vrot.slane %v334, %v629
  %v631 = vmul.f32 %v630, %v580
  %v632 = vmul.f32 %v630, %v581
  %v635 = vrot.slane %v631, 4
  %v636 = vrot.slane %v632, 4
  %v637 = vsel %vm79, %v635, %v636
  %v639 = vadd.f32 %v626, %v637
  %v640 = vmul.f32 %v639, 0.5
  %v641 = vmul.f32 %v640, 1.442695
  %v642 = vpow.pop %v641
  %643 = vst [vmem:[%s3] sm:$0xff] %v642
  // Predicated region
  $region10: #{network_freq_forward.1} parent=0 // pred_check
    _
  $region11: #{network_freq_forward.1} parent=0 // pred_check_branch
    %645 = sbr.rel (0) target = $region13
  $region12: #{network_freq_forward.1} parent=0 // pred_region
    _
  $region13: #{network_freq_forward.1} parent=0 // pred_fallthru
    _
  // Predicated region
  $region14: #{network_freq_forward.1} parent=0 // pred_check
    _
  $region15: #{network_freq_forward.1} parent=0 // pred_check_branch
    %647 = sbr.rel (0) target = $region17
  $region16: #{network_freq_forward.1} parent=0 // pred_region
    _
  $region17: #{network_freq_forward.1} parent=0 // pred_fallthru
    _
  // Predicated region
  $region18: #{network_freq_forward.1} parent=0 // pred_check
    _
  $region19: #{network_freq_forward.1} parent=0 // pred_check_branch
    %649 = sbr.rel (0) target = $region21
  $region20: #{network_freq_forward.1} parent=0 // pred_region
    _
  $region21: #{network_freq_forward.1} parent=0 // pred_fallthru
    _
  // Predicated region
  $region22: #{network_freq_forward.1} parent=0 // pred_check
    _
  $region23: #{network_freq_forward.1} parent=0 // pred_check_branch
    %651 = sbr.rel (0) target = $region25
  $region24: #{network_freq_forward.1} parent=0 // pred_region
    _
  $region25: #{network_freq_forward.1} parent=0 // pred_fallthru
    _

</llo_original>
